<compile_context>
chip_gen: v5e
topology: v5e:2x2
jax: 0.10.0
libtpu: 0.0.40
codegen_flags: <defaults>
</compile_context>

<pallas_src>
import functools
import math

import jax
import jax.numpy as jnp
from jax.experimental import pallas as pl
from jax.experimental.pallas import tpu as pltpu


# ----------------------------------------------------------------------------
# Buffer construction (matches torch __init__ exactly; float32, never re-cast)
# ----------------------------------------------------------------------------
def make_pe_buffer(max_len: int, d_model: int) -> jnp.ndarray:
    # Same recipe/limitation as the torch module: requires even d_model.
    assert d_model % 2 == 0, "sinusoidal PE recipe requires even d_model"
    position = jnp.arange(max_len, dtype=jnp.float32)[:, None]              # [L, 1]
    div_term = jnp.exp(
        jnp.arange(0, d_model, 2, dtype=jnp.float32) * (-math.log(10000.0) / d_model)
    )                                                                        # [D/2]
    ang = position * div_term                                                # [L, D/2]
    pe = jnp.zeros((max_len, 1, d_model), dtype=jnp.float32)
    pe = pe.at[:, 0, 0::2].set(jnp.sin(ang))
    pe = pe.at[:, 0, 1::2].set(jnp.cos(ang))
    return pe                                                                # [L, 1, D]


# ----------------------------------------------------------------------------
# Kernels: y = (x + pe)         (eval)
#          y = dropout(x + pe)  (training, inverted dropout)
# ----------------------------------------------------------------------------
def _pe_add_kernel(x_ref, pe_ref, o_ref):
    # pe block is either (TS, 1, D) (broadcast over batch) or exact-shaped.
    y = x_ref[...].astype(jnp.float32) + pe_ref[...]
    o_ref[...] = y.astype(o_ref.dtype)


def _pe_add_dropout_kernel(x_ref, pe_ref, bits_ref, o_ref, *, keep_threshold, inv_keep):
    y = x_ref[...].astype(jnp.float32) + pe_ref[...]
    # P(bits >= threshold) = 1 - p  -> keep mask; folded 1/(1-p) scale.
    keep = bits_ref[...] >= jnp.uint32(keep_threshold)
    o_ref[...] = jnp.where(keep, y * jnp.float32(inv_keep),
                           jnp.float32(0.0)).astype(o_ref.dtype)


# ----------------------------------------------------------------------------
# Tile-size selection from a VMEM byte budget
# ----------------------------------------------------------------------------
_VMEM_WORKING_SET = 32 * 1024 * 1024   # total double-buffered tile budget (all gens)
_VMEM_LIMIT = 48 * 1024 * 1024         # scoped VMEM request (< v7x 64 MiB physical)


def _select_seq_tile(S: int, per_step_bytes: int, *, tile_is_second_minor: bool) -> int:
    # per_step_bytes = bytes of all pipelined buffers for ONE seq step (single buffer);
    # the pipeline double-buffers every operand, hence the factor 2.
    ts = max(1, _VMEM_WORKING_SET // (2 * per_step_bytes))
    ts = min(ts, S)
    # Keep >= 2 grid programs when worthwhile so both v7x TensorCores get work.
    if ts == S and S >= 16:
        ts = -(-S // 2)
    if tile_is_second_minor and ts != S:
        # (8, 128) rule: second-minor block dim must be a multiple of 8 (or full).
        ts = min(S, max(8, (ts // 8) * 8))
    return ts


# ----------------------------------------------------------------------------
# Forward wrapper
# ----------------------------------------------------------------------------
def positional_encoding_forward(
    x: jnp.ndarray,
    pe: jnp.ndarray,
    *,
    p: float = 0.1,
    training: bool = False,
    rng_key=None,
) -> jnp.ndarray:
    """x: [S, B, D]; pe: [max_len, 1, D] float32 buffer from make_pe_buffer."""
    S, B, D = x.shape
    assert pe.shape[0] >= S and pe.shape[2] == D
    itemsize = jnp.dtype(x.dtype).itemsize
    use_dropout = bool(training) and p > 0.0
    if use_dropout and rng_key is None:
        rng_key = jax.random.PRNGKey(0)

    if D % 128 == 0:
        # Lane-dense already: D is a full lane multiple.  Tile over seq, keep
        # batch on sublanes; pe block (TS, 1, D) broadcasts over batch inside
        # the kernel -- no per-call slice/cast/tiling of pe.
        per_step = 2 * B * D * itemsize + D * 4
        if use_dropout:
            per_step += B * D * 4
        TS = _select_seq_tile(S, per_step, tile_is_second_minor=False)

        x_op, pe_op = x, pe
        x_block, pe_block = (TS, B, D), (TS, 1, D)
        x_map = lambda i: (i, 0, 0)
        pe_map = lambda i: (i, 0, 0)
        out_struct = jax.ShapeDtypeStruct((S, B, D), x.dtype)
        bits_shape, bits_block, bits_map = (S, B, D), (TS, B, D), x_map
        unflatten = lambda y: y
    else:
        # Small d_model: flatten to a lane-denser (S, B*D) view and tile the pe
        # row across batch once in the wrapper (cheap, since D is small).
        per_step = 2 * B * D * itemsize + B * D * 4
        if use_dropout:
            per_step += B * D * 4
        TS = _select_seq_tile(S, per_step, tile_is_second_minor=True)

        x_op = x.reshape(S, B * D)
        pe_op = jnp.tile(pe[:S, 0, :], (1, B))          # (S, B*D) float32
        x_block = pe_block = (TS, B * D)
        x_map = pe_map = lambda i: (i, 0)
        out_struct = jax.ShapeDtypeStruct((S, B * D), x.dtype)
        bits_shape, bits_block, bits_map = (S, B * D), (TS, B * D), x_map
        unflatten = lambda y: y.reshape(S, B, D)

    grid = (pl.cdiv(S, TS),)
    in_specs = [pl.BlockSpec(x_block, x_map), pl.BlockSpec(pe_block, pe_map)]
    operands = [x_op, pe_op]

    if use_dropout:
        # TODO(synk): on real TPU hardware the bits stream could be generated
        # in-kernel via pltpu.prng_seed / pltpu.prng_random_bits (saving one
        # HBM read stream), but those primitives have no interpret/CPU
        # lowering; host-generated bits keep the kernel portable.  RNG stream
        # differs from torch.nn.Dropout; semantics (Bernoulli keep, 1/(1-p)
        # scaling) match.
        bits = jax.random.bits(rng_key, bits_shape, dtype=jnp.uint32)
        in_specs.append(pl.BlockSpec(bits_block, bits_map))
        operands.append(bits)
        keep_threshold = min(int(round(p * 4294967296.0)), 4294967295)
        kernel = functools.partial(
            _pe_add_dropout_kernel,
            keep_threshold=keep_threshold,
            inv_keep=1.0 / (1.0 - p),
        )
    else:
        kernel = _pe_add_kernel

    out = pl.pallas_call(
        kernel,
        out_shape=out_struct,
        grid=grid,
        in_specs=in_specs,
        out_specs=pl.BlockSpec(x_block, x_map),
        compiler_params=pltpu.CompilerParams(
            dimension_semantics=("parallel",),
            vmem_limit_bytes=_VMEM_LIMIT,
        ),
    )(*operands)
    return unflatten(out)


# ----------------------------------------------------------------------------
if __name__ == "__main__":
    # Shapes consistent with the module: seq=8, batch=2, d_model=32.
    S, B, D = 8, 2, 32
    max_len = 64
    p = 0.1

    key = jax.random.PRNGKey(0)
    kx, kx2, kdrop = jax.random.split(key, 3)
    x = jax.random.normal(kx, (S, B, D), dtype=jnp.float32)
    pe = make_pe_buffer(max_len, D)

    # Eval mode (dropout = identity) -- small-D lane-flattened path.
    out = jax.block_until_ready(positional_encoding_forward(x, pe, p=p, training=False))
    ref = x + pe[:S]
    assert out.shape == (S, B, D)
    assert jnp.allclose(out, ref, atol=1e-6, rtol=1e-6)

    # Eval mode with d_model that is a lane multiple -- 3D broadcast path.
    D2 = 128
    x2 = jax.random.normal(kx2, (S, B, D2), dtype=jnp.float32)
    pe2 = make_pe_buffer(max_len, D2)
    out2 = jax.block_until_ready(positional_encoding_forward(x2, pe2, p=p, training=False))
    ref2 = x2 + pe2[:S]
    assert jnp.allclose(out2, ref2, atol=1e-6, rtol=1e-6)

    # Training mode (inverted dropout): each element is either 0 or ref/(1-p).
    out_tr = jax.block_until_ready(
        positional_encoding_forward(x, pe, p=p, training=True, rng_key=kdrop)
    )
    scaled = ref / (1.0 - p)
    is_kept = jnp.isclose(out_tr, scaled, atol=1e-5, rtol=1e-5)
    is_dropped = out_tr == 0.0
    assert bool(jnp.all(is_kept | is_dropped))

    print("KERNEL_OK")
</pallas_src>

<mosaic_0001>
module attributes {stable_mosaic.version = 11 : i64} {
  func.func @_pe_add_kernel(%arg0: i32, %arg1: memref<8x64xf32, #tpu.memory_space<vmem>>, %arg2: memref<8x64xf32, #tpu.memory_space<vmem>>, %arg3: memref<8x64xf32, #tpu.memory_space<vmem>>) attributes {dimension_semantics = [#tpu.dimension_semantics<parallel>], iteration_bounds = array<i64: 1>, scalar_prefetch = 0 : i64, scratch_operands = 0 : i64, tpu.core_type = #tpu.core_type<tc>, window_params = [{transform_indices = @transform_0, window_bounds = array<i64: 8, 64>}, {transform_indices = @transform_1, window_bounds = array<i64: 8, 64>}, {transform_indices = @transform_2, window_bounds = array<i64: 8, 64>}]} {
    %c0 = arith.constant 0 : index
    %c0_0 = arith.constant 0 : index
    %0 = vector.load %arg1[%c0, %c0_0] : memref<8x64xf32, #tpu.memory_space<vmem>>, vector<8x64xf32>
    %c0_1 = arith.constant 0 : index
    %c0_2 = arith.constant 0 : index
    %1 = vector.load %arg2[%c0_1, %c0_2] : memref<8x64xf32, #tpu.memory_space<vmem>>, vector<8x64xf32>
    %2 = arith.addf %0, %1 : vector<8x64xf32>
    %c0_3 = arith.constant 0 : index
    %c0_4 = arith.constant 0 : index
    %3 = vector.load %arg3[%c0_3, %c0_4] : memref<8x64xf32, #tpu.memory_space<vmem>>, vector<8x64xf32>
    tpu.vector_store %arg3[%c0_3, %c0_4], %2 {strides = array<i32>} : memref<8x64xf32, #tpu.memory_space<vmem>>, vector<8x64xf32>,
    return
  }
  func.func @transform_0(%arg0: i32) -> (i32, i32) {
    %c0_i32 = arith.constant 0 : i32
    %c0_i32_0 = arith.constant 0 : i32
    return %arg0, %c0_i32 : i32, i32
  }
  func.func @transform_1(%arg0: i32) -> (i32, i32) {
    %c0_i32 = arith.constant 0 : i32
    %c0_i32_0 = arith.constant 0 : i32
    return %arg0, %c0_i32 : i32, i32
  }
  func.func @transform_2(%arg0: i32) -> (i32, i32) {
    %c0_i32 = arith.constant 0 : i32
    %c0_i32_0 = arith.constant 0 : i32
    return %arg0, %c0_i32 : i32, i32
  }
}

</mosaic_0001>

<llo_original>
// kernel: tpu_custom_call.1
$region0: #{tpu_custom_call.1}
  #allocation0 [shape = 'u32[]', space=smem, size = 0x4, offset = 0x4, fixed_abs, tag = 'smem constant byte address 0x4 - core index']
  #allocation1 [shape = 'u32[72,128]{1,0:T(1,128)}', space=vmem, size = 0x9000, scoped, tag = 'internal scratch']
  %s0 = inlined_call_operand.hbm [shape: f32[8,64], index: 0, kind: input, shape index: {}]
  %s1 = inlined_call_operand.hbm [shape: f32[8,64], index: 1, kind: input, shape index: {}]
  %s2 = inlined_call_operand.hbm [shape: f32[8,64], index: 2, kind: output, shape index: {}]
  %s3 = sld [smem:[#allocation0]]
  $region26: #{tpu_custom_call.1} parent=0
    _
  %s5 = ssub.s32 1, %s3
  %s6 = scalar_select 0, %s5, %s3
  $region1: #{tpu_custom_call.1} parent=0
    #allocation2 [shape = 'u8[4096]{0}', space=vmem, size = 0x1000, scoped, tag = 'input window, operand 0, single buffered']
    #allocation3 [shape = 's32[1]{0}', space=sflag, size = 0x4, scoped, tag = 'scoped memory for tpu_custom_call.1']
    #allocation4 [shape = 's32[1]{0}', space=sflag, size = 0x4, scoped, tag = 'scoped memory for tpu_custom_call.1']
    #allocation5 [shape = 'u8[4096]{0}', space=vmem, size = 0x1000, scoped, tag = 'input window, operand 1, single buffered']
    #allocation6 [shape = 's32[1]{0}', space=sflag, size = 0x4, scoped, tag = 'scoped memory for tpu_custom_call.1']
    #allocation7 [shape = 'u8[4096]{0}', space=vmem, size = 0x1000, scoped, tag = 'output window, operand 0, single buffered']
    %7 = vsyncpa [#allocation3], 0
    %8 = vsyncpa [#allocation6], 0
    %9 = vsyncpa [#allocation4], 0
    // Predicated region
    $region2: #{tpu_custom_call.1} parent=1 // pred_check
      _
    $region3: #{tpu_custom_call.1} parent=1 // pred_check_branch
      %11 = sbr.rel (0) target = $region5
    $region4: #{tpu_custom_call.1} parent=1 // pred_region
      %13 = vsyncadd [#allocation3], 0
      %s15 = sshll.u32 %s0, 4
      %s16 = int_to_ptr.hbm [resolvable:$true] %s15
      %s17 = sshll.u32 [#allocation2], 4
      %s18 = int_to_ptr.vmem [resolvable:$true] %s17
      %20 = dma.hbm_to_vmem [thread:$0]  %s16, 128, %s18, [#allocation3]
    $region5: #{tpu_custom_call.1} parent=1 // pred_fallthru
      _
    // Predicated region
    $region6: #{tpu_custom_call.1} parent=1 // pred_check
      _
    $region7: #{tpu_custom_call.1} parent=1 // pred_check_branch
      %22 = sbr.rel (0) target = $region9
    $region8: #{tpu_custom_call.1} parent=1 // pred_region
      %24 = vsyncadd [#allocation6], 0
      %s26 = sshll.u32 %s1, 4
      %s27 = int_to_ptr.hbm [resolvable:$true] %s26
      %s28 = sshll.u32 [#allocation5], 4
      %s29 = int_to_ptr.vmem [resolvable:$true] %s28
      %31 = dma.hbm_to_vmem [thread:$0]  %s27, 128, %s29, [#allocation6]
    $region9: #{tpu_custom_call.1} parent=1 // pred_fallthru
      _
    // Predicated region
    $region10: #{tpu_custom_call.1} parent=1 // pred_check
      _
    $region11: #{tpu_custom_call.1} parent=1 // pred_check_branch
      %33 = sbr.rel (0) target = $region13
    $region12: #{tpu_custom_call.1} parent=1 // pred_region
      %35 = dma.done [#allocation3], 128
    $region13: #{tpu_custom_call.1} parent=1 // pred_fallthru
      _
    // Predicated region
    $region14: #{tpu_custom_call.1} parent=1 // pred_check
      _
    $region15: #{tpu_custom_call.1} parent=1 // pred_check_branch
      %37 = sbr.rel (0) target = $region17
    $region16: #{tpu_custom_call.1} parent=1 // pred_region
      %39 = dma.done [#allocation6], 128
    $region17: #{tpu_custom_call.1} parent=1 // pred_fallthru
      _
    %v40 = vld [vmem:[#allocation2] sm:$0xff]
    %v41 = vld [vmem:[#allocation5] sm:$0xff]
    %v42 = vadd.f32 %v40, %v41
    %vm43 = vcmask 523264
    %44 = vst.msk [vmem:[#allocation7] sm:$0xff] %vm43, %v42
    // Predicated region
    $region18: #{tpu_custom_call.1} parent=1 // pred_check
      _
    $region19: #{tpu_custom_call.1} parent=1 // pred_check_branch
      %46 = sbr.rel (0) target = $region21
    $region20: #{tpu_custom_call.1} parent=1 // pred_region
      %48 = vsyncadd [#allocation4], 0
      %s50 = sshll.u32 [#allocation7], 4
      %s51 = int_to_ptr.vmem [resolvable:$true] %s50
      %s52 = sshll.u32 %s2, 4
      %s53 = int_to_ptr.hbm [resolvable:$true] %s52
      %55 = dma.vmem_to_hbm [thread:$0]  %s51, 128, %s53, [#allocation4]
    $region21: #{tpu_custom_call.1} parent=1 // pred_fallthru
      _
    // Predicated region
    $region22: #{tpu_custom_call.1} parent=1 // pred_check
      _
    $region23: #{tpu_custom_call.1} parent=1 // pred_check_branch
      %57 = sbr.rel (0) target = $region25
    $region24: #{tpu_custom_call.1} parent=1 // pred_region
      %59 = dma.done [#allocation4], 128
    $region25: #{tpu_custom_call.1} parent=1 // pred_fallthru
      _
    %60 = vsyncpa [#allocation3], 1
    %61 = vsyncpa [#allocation6], 1
    %62 = vsyncpa [#allocation4], 1

</llo_original>
